<compile_context>
chip_gen: v5e
topology: v5e:2x2
jax: 0.10.0
libtpu: 0.0.40
codegen_flags: <defaults>
</compile_context>

<pallas_src>
import functools

import numpy as np
import jax
import jax.numpy as jnp
from jax.experimental import pallas as pl
from jax.experimental.pallas import tpu as pltpu


def _round_up(x, m):
    return (x + m - 1) // m * m


def default_matmul_dtype(din):
    """bf16 MXU operands where it pays off; f32 where it does not.

    v6e/v7x MXUs are bf16-native, so bf16 operands (f32 accumulation) are at
    least as fast and halve weight HBM/VMEM bytes.  On v5e keep f32 operands
    unless the contraction dim is large enough (>=128) for MXU rate to matter.
    """
    try:
        kind = jax.devices()[0].device_kind.lower()
    except Exception:
        return jnp.bfloat16
    is_v5e = ("v5e" in kind) or ("v5 lite" in kind) or ("v5lite" in kind)
    if is_v5e and din < 128:
        return jnp.float32
    return jnp.bfloat16


def _maxblock_kernel_full_w(x_ref, w_ref, b_ref, o_ref, *, matmul_dtype):
    # Fast path: whole weight resident in VMEM, 1-D grid over batch tiles.
    # x_ref: (TB, N, Din)  w_ref: (Din, Dout_p)  b_ref: (1, Dout_p)
    # o_ref: (TB, N, Dout_p)
    tb, n, din = x_ref.shape
    x = x_ref[...]                                       # f32
    xm = jnp.max(x, axis=1, keepdims=True)               # max over the set axis
    # Merge (TB, N) -> rows; last dim unchanged so the reshape is layout-free.
    xc = (x - xm).reshape(tb * n, din)
    y = jnp.dot(xc.astype(matmul_dtype), w_ref[...],
                preferred_element_type=jnp.float32)      # one big MXU matmul
    y = y + b_ref[...]                                   # f32 bias broadcast
    o_ref[...] = y.reshape(tb, n, -1).astype(o_ref.dtype)


def _maxblock_kernel_tiled_w(x_ref, w_ref, b_ref, o_ref, xc_ref, *, matmul_dtype):
    # Fallback when the full weight does not fit VMEM.
    # grid = (batch tiles [outer, parallel], Dout tiles [inner, arbitrary]).
    # The x block index depends only on the batch axis, so the x tile stays
    # resident across the Dout sweep; (x - xm) is computed once per batch tile
    # into the VMEM scratch and reused for every weight tile.
    tb, n, din = x_ref.shape

    @pl.when(pl.program_id(1) == 0)
    def _():
        x = x_ref[...]
        xm = jnp.max(x, axis=1, keepdims=True)
        xc_ref[...] = (x - xm).reshape(tb * n, din).astype(matmul_dtype)

    y = jnp.dot(xc_ref[...], w_ref[...], preferred_element_type=jnp.float32)
    y = y + b_ref[...]
    o_ref[...] = y.reshape(tb, n, -1).astype(o_ref.dtype)


def maxblock(x, w_t, b, *, matmul_dtype=None, out_dtype=None,
             target_rows=1024, dout_tile=1024, vmem_limit_bytes=None,
             vmem_budget_bytes=32 << 20):
    """x: (B, N, Din); w_t: (Din, Dout); b: (Dout,) or (1, Dout) -> (B, N, Dout)."""
    B, N, Din = x.shape
    Dout = w_t.shape[1]
    if matmul_dtype is None:
        matmul_dtype = default_matmul_dtype(Din)
    if out_dtype is None:
        out_dtype = x.dtype            # pass out_dtype=jnp.bfloat16 to halve output HBM writes

    b = jnp.asarray(b).reshape(1, Dout).astype(jnp.float32)

    # Lane-dense output stores only when cheap: pad Dout to a 128 multiple only
    # if that adds <= 25% extra columns (padded cols compute 0, sliced off).
    Dout_p = _round_up(Dout, 128)
    if Dout_p != Dout and (Dout_p - Dout) * 4 > Dout:
        Dout_p = Dout                  # small Dout: keep exact width, masked vst is cheaper
    if Dout_p != Dout:
        w_t = jnp.pad(w_t, ((0, 0), (0, Dout_p - Dout)))
        b = jnp.pad(b, ((0, 0), (0, Dout_p - Dout)))
    w_t = w_t.astype(matmul_dtype)

    w_bytes = Din * Dout_p * np.dtype(matmul_dtype).itemsize
    x_isz = np.dtype(x.dtype).itemsize
    out_isz = np.dtype(out_dtype).itemsize

    # Fast path whenever the whole weight comfortably fits the VMEM budget.
    full_weight = w_bytes <= (vmem_budget_bytes // 4)

    if full_weight:
        dout_blk = Dout_p
    else:
        dout_blk = min(Dout_p, _round_up(dout_tile, 128))
        while Dout_p % dout_blk:
            dout_blk -= 128

    # Batch tile: largest divisor of B whose rows fit target_rows and whose
    # double-buffered x/out blocks (+ weight) fit the VMEM budget.  Divisor-based
    # so x never needs a wrapper-side jnp.pad (extra HBM pass).
    def fits(t):
        return (2 * t * N * (Din * x_isz + dout_blk * out_isz)
                + 2 * w_bytes) <= vmem_budget_bytes

    candidates = [t for t in range(1, B + 1)
                  if B % t == 0 and (t == 1 or t * N <= target_rows) and fits(t)]
    if not candidates:
        candidates = [1]
    # Prefer >= 2 batch tiles so both v7x TensorCores get work.
    multi = [t for t in candidates if B // t >= 2]
    tb = max(multi) if multi else max(candidates)
    n_i = B // tb

    if full_weight:
        kernel = functools.partial(_maxblock_kernel_full_w,
                                   matmul_dtype=matmul_dtype)
        grid = (n_i,)
        in_specs = [
            pl.BlockSpec((tb, N, Din), lambda i: (i, 0, 0)),
            pl.BlockSpec((Din, Dout_p), lambda i: (0, 0)),   # resident weight
            pl.BlockSpec((1, Dout_p), lambda i: (0, 0)),     # resident bias
        ]
        out_specs = pl.BlockSpec((tb, N, Dout_p), lambda i: (i, 0, 0))
        scratch_shapes = []
        dim_sem = ("parallel",)
    else:
        kernel = functools.partial(_maxblock_kernel_tiled_w,
                                   matmul_dtype=matmul_dtype)
        n_j = Dout_p // dout_blk
        grid = (n_i, n_j)                                    # batch outer, Dout inner
        in_specs = [
            pl.BlockSpec((tb, N, Din), lambda i, j: (i, 0, 0)),   # resident x tile
            pl.BlockSpec((Din, dout_blk), lambda i, j: (0, j)),   # streamed weight
            pl.BlockSpec((1, dout_blk), lambda i, j: (0, j)),
        ]
        out_specs = pl.BlockSpec((tb, N, dout_blk), lambda i, j: (i, 0, j))
        scratch_shapes = [pltpu.VMEM((tb * N, Din), matmul_dtype)]
        dim_sem = ("parallel", "arbitrary")

    out = pl.pallas_call(
        kernel,
        out_shape=jax.ShapeDtypeStruct((B, N, Dout_p), out_dtype),
        grid_spec=pltpu.PrefetchScalarGridSpec(
            num_scalar_prefetch=0,
            grid=grid,
            in_specs=in_specs,
            out_specs=out_specs,
            scratch_shapes=scratch_shapes,
        ),
        compiler_params=pltpu.CompilerParams(
            dimension_semantics=dim_sem,
            # Raise when sweeping larger tiles (<=48 MiB on v7x, which has half
            # the VMEM of v5e/v6e; v5e's scoped default is only ~16 MiB).
            vmem_limit_bytes=vmem_limit_bytes,
        ),
    )(x, w_t, b)

    if Dout_p != Dout:
        out = out[:, :, :Dout]          # skipped entirely when nothing was padded
    return out


def maxblock_ref(x, w_t, b, matmul_dtype=jnp.float32):
    xm = jnp.max(x, axis=1, keepdims=True)
    xc = (x - xm).astype(matmul_dtype)
    y = jnp.einsum("bnd,de->bne", xc, w_t.astype(matmul_dtype),
                   preferred_element_type=jnp.float32)
    return (y + jnp.asarray(b).reshape(1, 1, -1).astype(jnp.float32)).astype(x.dtype)


if __name__ == "__main__":
    key = jax.random.PRNGKey(0)
    k1, k2, k3 = jax.random.split(key, 3)

    B, N, IN_DIM, OUT_DIM = 2, 8, 32, 32

    x = jax.random.normal(k1, (B, N, IN_DIM), dtype=jnp.float32)

    # Deterministic init mimicking nn.Linear's uniform(-1/sqrt(in), 1/sqrt(in))
    bound = 1.0 / (IN_DIM ** 0.5)
    w = jax.random.uniform(k2, (OUT_DIM, IN_DIM), minval=-bound, maxval=bound,
                           dtype=jnp.float32)            # PyTorch layout (out, in)
    bias = jax.random.uniform(k3, (OUT_DIM,), minval=-bound, maxval=bound,
                              dtype=jnp.float32)

    w_t = w.T                                            # (IN_DIM, OUT_DIM)
    mm_dtype = default_matmul_dtype(IN_DIM)

    out = maxblock(x, w_t, bias, matmul_dtype=mm_dtype)
    jax.block_until_ready(out)

    ref = maxblock_ref(x, w_t, bias, matmul_dtype=mm_dtype)
    assert out.shape == (B, N, OUT_DIM)
    assert jnp.allclose(out, ref, atol=1e-3, rtol=1e-3), "mismatch vs reference"

    print("KERNEL_OK")
</pallas_src>

<mosaic_0001>
module attributes {stable_mosaic.version = 11 : i64} {
  func.func @_maxblock_kernel_full_w(%arg0: i32, %arg1: memref<1x8x32xf32, #tpu.memory_space<vmem>>, %arg2: memref<32x32xbf16, #tpu.memory_space<vmem>>, %arg3: memref<1x32xf32, #tpu.memory_space<vmem>>, %arg4: memref<1x8x32xf32, #tpu.memory_space<vmem>>) attributes {dimension_semantics = [#tpu.dimension_semantics<parallel>], iteration_bounds = array<i64: 2>, scalar_prefetch = 0 : i64, scratch_operands = 0 : i64, tpu.core_type = #tpu.core_type<tc>, window_params = [{transform_indices = @transform_0, window_bounds = array<i64: 1, 8, 32>}, {pipeline_mode = #tpu.pipeline_mode<synchronous>, transform_indices = @transform_1, window_bounds = array<i64: 32, 32>}, {pipeline_mode = #tpu.pipeline_mode<synchronous>, transform_indices = @transform_2, window_bounds = array<i64: 1, 32>}, {transform_indices = @transform_3, window_bounds = array<i64: 1, 8, 32>}]} {
    %c0 = arith.constant 0 : index
    %c0_0 = arith.constant 0 : index
    %c0_1 = arith.constant 0 : index
    %0 = vector.load %arg1[%c0, %c0_0, %c0_1] : memref<1x8x32xf32, #tpu.memory_space<vmem>>, vector<1x8x32xf32>
    %cst = arith.constant dense<0xFF800000> : vector<1x32xf32>
    %1 = vector.multi_reduction <maximumf>, %0, %cst [1] : vector<1x8x32xf32> to vector<1x32xf32>
    %2 = vector.shape_cast %1 : vector<1x32xf32> to vector<1x1x32xf32>
    %3 = vector.broadcast %2 : vector<1x1x32xf32> to vector<1x8x32xf32>
    %4 = arith.subf %0, %3 : vector<1x8x32xf32>
    %5 = vector.shape_cast %4 : vector<1x8x32xf32> to vector<8x32xf32>
    %6 = arith.truncf %5 : vector<8x32xf32> to vector<8x32xbf16>
    %c0_2 = arith.constant 0 : index
    %c0_3 = arith.constant 0 : index
    %7 = vector.load %arg2[%c0_2, %c0_3] : memref<32x32xbf16, #tpu.memory_space<vmem>>, vector<32x32xbf16>
    %cst_4 = arith.constant dense<0.000000e+00> : vector<8x32xf32>
    %8 = tpu.matmul %6, %7, %cst_4 {dimension_numbers = #tpu.dot_dimension_numbers<[1], [0], [0], [1], [0, 0, 1, 1], [], []>} : vector<8x32xbf16>, vector<32x32xbf16>, vector<8x32xf32> -> vector<8x32xf32>
    %c0_5 = arith.constant 0 : index
    %c0_6 = arith.constant 0 : index
    %9 = vector.load %arg3[%c0_5, %c0_6] : memref<1x32xf32, #tpu.memory_space<vmem>>, vector<1x32xf32>
    %10 = vector.broadcast %9 : vector<1x32xf32> to vector<8x32xf32>
    %11 = arith.addf %8, %10 : vector<8x32xf32>
    %12 = vector.shape_cast %11 : vector<8x32xf32> to vector<1x8x32xf32>
    %c0_7 = arith.constant 0 : index
    %c0_8 = arith.constant 0 : index
    %c0_9 = arith.constant 0 : index
    %13 = vector.load %arg4[%c0_7, %c0_8, %c0_9] : memref<1x8x32xf32, #tpu.memory_space<vmem>>, vector<1x8x32xf32>
    tpu.vector_store %arg4[%c0_7, %c0_8, %c0_9], %12 {strides = array<i32>} : memref<1x8x32xf32, #tpu.memory_space<vmem>>, vector<1x8x32xf32>,
    return
  }
  func.func @transform_0(%arg0: i32) -> (i32, i32, i32) {
    %c0_i32 = arith.constant 0 : i32
    %c0_i32_0 = arith.constant 0 : i32
    %c0_i32_1 = arith.constant 0 : i32
    return %arg0, %c0_i32, %c0_i32_0 : i32, i32, i32
  }
  func.func @transform_1(%arg0: i32) -> (i32, i32) {
    %c0_i32 = arith.constant 0 : i32
    %c0_i32_0 = arith.constant 0 : i32
    %c0_i32_1 = arith.constant 0 : i32
    return %c0_i32, %c0_i32_0 : i32, i32
  }
  func.func @transform_2(%arg0: i32) -> (i32, i32) {
    %c0_i32 = arith.constant 0 : i32
    %c0_i32_0 = arith.constant 0 : i32
    %c0_i32_1 = arith.constant 0 : i32
    return %c0_i32, %c0_i32_0 : i32, i32
  }
  func.func @transform_3(%arg0: i32) -> (i32, i32, i32) {
    %c0_i32 = arith.constant 0 : i32
    %c0_i32_0 = arith.constant 0 : i32
    %c0_i32_1 = arith.constant 0 : i32
    return %arg0, %c0_i32, %c0_i32_0 : i32, i32, i32
  }
}

</mosaic_0001>

<llo_original>
// kernel: tpu_custom_call.1
$region0: #{tpu_custom_call.1}
  #allocation0 [shape = 'u32[]', space=smem, size = 0x4, offset = 0x4, fixed_abs, tag = 'smem constant byte address 0x4 - core index']
  #allocation1 [shape = 'u32[72,128]{1,0:T(1,128)}', space=vmem, size = 0x9000, scoped, tag = 'internal scratch']
  %s0 = inlined_call_operand.hbm [shape: f32[2,8,32], index: 0, kind: input, shape index: {}]
  %s1 = inlined_call_operand.hbm [shape: bf16[32,32], index: 1, kind: input, shape index: {}]
  %s2 = inlined_call_operand.vmem [shape: f32[1,32], index: 2, kind: input, shape index: {}]
  %s3 = inlined_call_operand.hbm [shape: f32[2,8,32], index: 3, kind: output, shape index: {}]
  %s4 = sld [smem:[#allocation0]]
  $region53: #{tpu_custom_call.1} parent=0
    _
  %s6 = ssub.s32 1, %s4
  %s7 = scalar_select 0, %s6, %s4
  $region1: #{tpu_custom_call.1} parent=0
    #allocation2 [shape = 'u8[8192]{0}', space=vmem, size = 0x2000, scoped, tag = 'input window, operand 0']
    #allocation3 [shape = 's32[2]{0}', space=sflag, size = 0x8, scoped, tag = 'scoped memory for tpu_custom_call.1']
    #allocation4 [shape = 's32[2]{0}', space=sflag, size = 0x8, scoped, tag = 'scoped memory for tpu_custom_call.1']
    #allocation5 [shape = 'u8[8192]{0}', space=vmem, size = 0x2000, scoped, tag = 'input window, operand 1, single buffered']
    #allocation6 [shape = 's32[1]{0}', space=sflag, size = 0x4, scoped, tag = 'scoped memory for tpu_custom_call.1']
    #allocation7 [shape = 'u8[8192]{0}', space=vmem, size = 0x2000, scoped, tag = 'output window, operand 0']
    %8 = vsyncpa [#allocation3], 0
    %s9 = scalar_lea.sflag [#allocation3], 1
    %10 = vsyncpa %s9, 0
    %11 = vsyncpa [#allocation6], 0
    %12 = vsyncpa [#allocation4], 0
    %s13 = scalar_lea.sflag [#allocation4], 1
    %14 = vsyncpa %s13, 0
    loop: start=0, step=1, limit=4
    $region2: #{tpu_custom_call.1} parent=1 // loop_pre_header
      _
    $region3: #{tpu_custom_call.1} parent=1 // loop_header
      %s16 = sphi 0, %s20
      %p17 = scmp.ge.s32.totalorder %s16, 4
      %s26 = sphi 0, %s28
      %s29 = sphi 0, %s26
      %s30 = sphi 0, %s29
      %s46 = sphi 0, %s30
      %s50 = sphi 0, %s50
      %s52 = sphi 0, %s50
      %s53 = sphi 0, %s52
      %s67 = sphi 0, %s53
      %s71 = sphi 0, %s71
      %s73 = sphi 0, %s71
      %s74 = sphi 0, %s73
      %s88 = sphi 0, %s74
      %s94 = sphi 0, %s96
      %s97 = sphi 0, %s94
      %s98 = sphi 0, %s97
      %s114 = sphi 0, %s98
    $region4: #{tpu_custom_call.1} parent=1 // loop_header_branch
      %19 = sbr.rel (%p17) target = $region8
    $region5: #{tpu_custom_call.1} parent=1 // loop_body
      %s21 = ssub.s32 %s16, 1
      %s22 = ssub.s32 %s16, 2
      %s23 = sadd.s32 %s16, 1
      %s24 = ssub.s32 %s16, %s23
      %p25 = scmp.eq.s32.totalorder %s24, 0
      %s27 = sadd.s32 %s26, 1
      %s28 = scalar_select %p25, %s26, %s27
      %p31 = pneg %p25
      %p32 = scmp.eq.s32.totalorder %s16, 1
      %p33 = por %p31, %p32
      %p34 = scmp.ne.s32.totalorder %s26, %s29
      %p35 = scmp.eq.s32.totalorder %s16, 0
      %p36 = por %p34, %p35
      %p37 = scmp.ne.s32.totalorder %s26, %s29
      %p38 = scmp.eq.s32.totalorder %s21, 1
      %p39 = por %p37, %p38
      %p40 = scmp.ne.s32.totalorder %s29, %s30
      %p41 = scmp.eq.s32.totalorder %s21, 0
      %p42 = por %p40, %p41
      %p43 = scmp.ne.s32.totalorder %s29, %s30
      %p44 = scmp.eq.s32.totalorder %s22, 1
      %p45 = por %p43, %p44
      %p47 = scmp.ne.s32.totalorder %s30, %s46
      %p48 = scmp.eq.s32.totalorder %s22, 0
      %p49 = por %p47, %p48
      %s51 = sadd.s32 %s50, 1
      %p54 = scmp.eq.s32.totalorder %s16, 1
      %p55 = scmp.ne.s32.totalorder %s50, %s52
      %p56 = scmp.eq.s32.totalorder %s16, 0
      %p57 = por %p55, %p56
      %p58 = scmp.ne.s32.totalorder %s50, %s52
      %p59 = scmp.eq.s32.totalorder %s21, 1
      %p60 = por %p58, %p59
      %p61 = scmp.ne.s32.totalorder %s52, %s53
      %p62 = scmp.eq.s32.totalorder %s21, 0
      %p63 = por %p61, %p62
      %p64 = scmp.ne.s32.totalorder %s52, %s53
      %p65 = scmp.eq.s32.totalorder %s22, 1
      %p66 = por %p64, %p65
      %p68 = scmp.ne.s32.totalorder %s53, %s67
      %p69 = scmp.eq.s32.totalorder %s22, 0
      %p70 = por %p68, %p69
      %s72 = sadd.s32 %s71, 1
      %p75 = scmp.eq.s32.totalorder %s16, 1
      %p76 = scmp.ne.s32.totalorder %s71, %s73
      %p77 = scmp.eq.s32.totalorder %s16, 0
      %p78 = por %p76, %p77
      %p79 = scmp.ne.s32.totalorder %s71, %s73
      %p80 = scmp.eq.s32.totalorder %s21, 1
      %p81 = por %p79, %p80
      %p82 = scmp.ne.s32.totalorder %s73, %s74
      %p83 = scmp.eq.s32.totalorder %s21, 0
      %p84 = por %p82, %p83
      %p85 = scmp.ne.s32.totalorder %s73, %s74
      %p86 = scmp.eq.s32.totalorder %s22, 1
      %p87 = por %p85, %p86
      %p89 = scmp.ne.s32.totalorder %s74, %s88
      %p90 = scmp.eq.s32.totalorder %s22, 0
      %p91 = por %p89, %p90
      %s92 = ssub.s32 %s16, %s23
      %p93 = scmp.eq.s32.totalorder %s92, 0
      %s95 = sadd.s32 %s94, 1
      %s96 = scalar_select %p93, %s94, %s95
      %p99 = pneg %p93
      %p100 = scmp.eq.s32.totalorder %s16, 1
      %p101 = por %p99, %p100
      %p102 = scmp.ne.s32.totalorder %s94, %s97
      %p103 = scmp.eq.s32.totalorder %s16, 0
      %p104 = por %p102, %p103
      %p105 = scmp.ne.s32.totalorder %s94, %s97
      %p106 = scmp.eq.s32.totalorder %s21, 1
      %p107 = por %p105, %p106
      %p108 = scmp.ne.s32.totalorder %s97, %s98
      %p109 = scmp.eq.s32.totalorder %s21, 0
      %p110 = por %p108, %p109
      %p111 = scmp.ne.s32.totalorder %s97, %s98
      %p112 = scmp.eq.s32.totalorder %s22, 1
      %p113 = por %p111, %p112
      %p115 = scmp.ne.s32.totalorder %s98, %s114
      %p116 = scmp.eq.s32.totalorder %s22, 0
      %p117 = por %p115, %p116
      %p118 = scmp.le.s32.totalorder 1, %s16
      %p119 = scmp.lt.s32.totalorder %s16, 3
      %p120 = pnand %p118, %p119
      %p121 = pneg %p120
      // Predicated region
      $region9: #{tpu_custom_call.1} parent=5 // pred_check
        _
      $region10: #{tpu_custom_call.1} parent=5 // pred_check_branch
        %123 = sbr.rel (%p120) target = $region12
      $region11: #{tpu_custom_call.1} parent=5 // pred_region
        %s124 = ssub.s32 %s16, 1
        // Predicated region
        $region13: #{tpu_custom_call.1} parent=11 // pred_check
          %p125 = pneg %p63
        $region14: #{tpu_custom_call.1} parent=11 // pred_check_branch
          %127 = sbr.rel (%p125) target = $region16
        $region15: #{tpu_custom_call.1} parent=11 // pred_region
          %129 = vsyncadd [#allocation6], 0
          %s130 = sshll.u32 %s1, 4
          %s131 = int_to_ptr.hbm [resolvable:$true] %s130
          %s132 = sshll.u32 [#allocation5], 4
          %s133 = int_to_ptr.vmem [resolvable:$true] %s132
          %138 = dma.hbm_to_vmem [thread:$0]  %s131, 256, %s133, [#allocation6], 64, 64, 4
        $region16: #{tpu_custom_call.1} parent=11 // pred_fallthru
          _
        // Predicated region
        $region17: #{tpu_custom_call.1} parent=11 // pred_check
          %p139 = pneg %p84
        $region18: #{tpu_custom_call.1} parent=11 // pred_check_branch
          %141 = sbr.rel (%p139) target = $region20
        $region19: #{tpu_custom_call.1} parent=11 // pred_region
          _
        $region20: #{tpu_custom_call.1} parent=11 // pred_fallthru
          _
      $region12: #{tpu_custom_call.1} parent=5 // pred_fallthru
        _
      %p142 = scmp.lt.s32.totalorder %s16, 2
      // Predicated region
      $region21: #{tpu_custom_call.1} parent=5 // pred_check
        %p143 = pneg %p142
      $region22: #{tpu_custom_call.1} parent=5 // pred_check_branch
        %145 = sbr.rel (%p143) target = $region24
      $region23: #{tpu_custom_call.1} parent=5 // pred_region
        // Predicated region
        $region25: #{tpu_custom_call.1} parent=23 // pred_check
          %p146 = pneg %p36
        $region26: #{tpu_custom_call.1} parent=23 // pred_check_branch
          %148 = sbr.rel (%p146) target = $region28
        $region27: #{tpu_custom_call.1} parent=23 // pred_region
          %s149 = sand.u32 %s26, 1
          %s150 = scalar_lea.sflag [#allocation3], %s149
          %s151 = sand.u32 %s26, 1
          %s152 = smul.addr %s151, 8
          %s153 = scalar_lea.vmem [#allocation2], %s152
          %155 = vsyncadd %s150, 0
          %s156 = smul.addr %s16, 8
          %s157 = scalar_lea.hbm %s0, %s156
          %s159 = sshll.u32 %s157, 4
          %s160 = int_to_ptr.hbm [resolvable:$true] %s159
          %s161 = sshll.u32 %s153, 4
          %s162 = int_to_ptr.vmem [resolvable:$true] %s161
          %164 = dma.hbm_to_vmem [thread:$0]  %s160, 128, %s162, %s150
        $region28: #{tpu_custom_call.1} parent=23 // pred_fallthru
          _
      $region24: #{tpu_custom_call.1} parent=5 // pred_fallthru
        _
      %p165 = scmp.le.s32.totalorder 1, %s16
      %p166 = scmp.lt.s32.totalorder %s16, 3
      %p167 = pnand %p165, %p166
      %p168 = pneg %p167
      // Predicated region
      $region29: #{tpu_custom_call.1} parent=5 // pred_check
        _
      $region30: #{tpu_custom_call.1} parent=5 // pred_check_branch
        %170 = sbr.rel (%p167) target = $region32
      $region31: #{tpu_custom_call.1} parent=5 // pred_region
        %s171 = ssub.s32 %s16, 1
        %s172 = sand.u32 %s29, 1
        %s173 = scalar_lea.sflag [#allocation3], %s172
        %s174 = sand.u32 %s29, 1
        %s175 = smul.addr %s174, 8
        %s176 = scalar_lea.vmem [#allocation2], %s175
        // Predicated region
        $region33: #{tpu_custom_call.1} parent=31 // pred_check
          %p177 = pneg %p42
        $region34: #{tpu_custom_call.1} parent=31 // pred_check_branch
          %179 = sbr.rel (%p177) target = $region36
        $region35: #{tpu_custom_call.1} parent=31 // pred_region
          %181 = dma.done %s173, 128
        $region36: #{tpu_custom_call.1} parent=31 // pred_fallthru
          _
        // Predicated region
        $region37: #{tpu_custom_call.1} parent=31 // pred_check
          %p182 = pneg %p63
        $region38: #{tpu_custom_call.1} parent=31 // pred_check_branch
          %184 = sbr.rel (%p182) target = $region40
        $region39: #{tpu_custom_call.1} parent=31 // pred_region
          %186 = dma.done [#allocation6], 256
        $region40: #{tpu_custom_call.1} parent=31 // pred_fallthru
          _
        %s187 = sand.u32 %s29, 1
        %s188 = scalar_lea.sflag [#allocation3], %s187
        %s189 = sand.u32 %s29, 1
        %s190 = smul.addr %s189, 8
        %s191 = scalar_lea.vmem [#allocation2], %s190
        %p192 = pneg %p42
        %p193 = pneg %p39
        %p194 = pneg %p63
        %p195 = pneg %p60
        %p196 = pneg %p84
        %p197 = pneg %p81
        %p198 = pneg %p110
        %p199 = pneg %p107
        %s200 = sand.u32 %s97, 1
        %s201 = scalar_lea.sflag [#allocation4], %s200
        %s202 = sand.u32 %s97, 1
        %s203 = smul.addr %s202, 8
        %s204 = scalar_lea.vmem [#allocation7], %s203
        %v206 = vld [vmem:[%s176] sm:$0xff]
        %vm207 = vcmask 261120
        %v208 = vsel %vm207, %v206, -inf
        %v209 = vrot.slane %v208, 4
        %v210 = vmax.f32 %v208, %v209
        %v211 = vrot.slane %v210, 2
        %v212 = vmax.f32 %v210, %v211
        %v213 = vrot.slane %v212, 1
        %v214 = vmax.f32 %v212, %v213
        %v215 = vsub.f32 %v206, %v214
        %v216 = vpack.c.bf16 %v215, %v215
        %v217 = vld [vmem:[#allocation5] sm:$0xf]
        %v218 = vld [vmem:[#allocation5 + $0x4] sm:$0xf]
        %v219 = vld [vmem:[#allocation5 + $0x8] sm:$0xf]
        %v220 = vld [vmem:[#allocation5 + $0xc] sm:$0xf]
        %v221 = vld [vmem:[%s2] sm:$0x1]
        %v223 = vperm.slane %v221, 0
        %v229 = vunpack.c.l.b16 %v217
        %v230 = vunpack.c.l.b16 %v218
        %v231 = vunpack.c.l.b16 %v219
        %v232 = vunpack.c.l.b16 %v220
        %v233 = vpack.c.b16 %v230, %v229
        %v234 = vpack.c.b16 %v232, %v231
        %v238 = vsel %vm207, %v216, 0
        %240 = vmatpush.bf16.msra.mxu0 0
        %241 = vmatpush.bf16.msra.mxu0 0
        %242 = vmatpush.bf16.msra.mxu0 0
        %243 = vmatpush.bf16.msra.mxu0 0
        %244 = vmatpush.bf16.msra.mxu0 0
        %245 = vmatpush.bf16.msra.mxu0 0
        %246 = vmatpush.bf16.msra.mxu0 %v234
        %247 = vmatpush.bf16.msra.mxu0 %v233
        %248 = vmatmul.bf16.gmra.mxu0 %v238
        %v249 = vpop.f32.mrf.mxu0
        %v250 = vadd.f32 %v223, %v249
        %v251 = vpop.f32.mrf.mxu0
        %252 = vdwg.mxu0
        %253 = vst.msk [vmem:[%s204] sm:$0xff] %vm207, %v250
        %s254 = sand.u32 %s97, 1
        %s255 = scalar_lea.sflag [#allocation4], %s254
        %s256 = sand.u32 %s97, 1
        %s257 = smul.addr %s256, 8
        %s258 = scalar_lea.vmem [#allocation7], %s257
        // Predicated region
        $region41: #{tpu_custom_call.1} parent=31 // pred_check
          %p259 = pneg %p107
        $region42: #{tpu_custom_call.1} parent=31 // pred_check_branch
          %261 = sbr.rel (%p259) target = $region44
        $region43: #{tpu_custom_call.1} parent=31 // pred_region
          %263 = vsyncadd %s255, 0
          %s264 = smul.addr %s21, 8
          %s265 = scalar_lea.hbm %s3, %s264
          %s267 = sshll.u32 %s258, 4
          %s268 = int_to_ptr.vmem [resolvable:$true] %s267
          %s269 = sshll.u32 %s265, 4
          %s270 = int_to_ptr.hbm [resolvable:$true] %s269
          %272 = dma.vmem_to_hbm [thread:$0]  %s268, 128, %s270, %s255
        $region44: #{tpu_custom_call.1} parent=31 // pred_fallthru
          _
      $region32: #{tpu_custom_call.1} parent=5 // pred_fallthru
        _
      %p273 = scmp.le.s32.totalorder 2, %s16
      // Predicated region
      $region45: #{tpu_custom_call.1} parent=5 // pred_check
        %p274 = pneg %p273
      $region46: #{tpu_custom_call.1} parent=5 // pred_check_branch
        %276 = sbr.rel (%p274) target = $region48
      $region47: #{tpu_custom_call.1} parent=5 // pred_region
        %s277 = ssub.s32 %s16, 2
        // Predicated region
        $region49: #{tpu_custom_call.1} parent=47 // pred_check
          %p278 = pneg %p113
        $region50: #{tpu_custom_call.1} parent=47 // pred_check_branch
          %280 = sbr.rel (%p278) target = $region52
        $region51: #{tpu_custom_call.1} parent=47 // pred_region
          %s281 = sand.u32 %s98, 1
          %s282 = scalar_lea.sflag [#allocation4], %s281
          %s283 = sand.u32 %s98, 1
          %s284 = smul.addr %s283, 8
          %s285 = scalar_lea.vmem [#allocation7], %s284
          %287 = dma.done %s282, 128
        $region52: #{tpu_custom_call.1} parent=47 // pred_fallthru
          _
      $region48: #{tpu_custom_call.1} parent=5 // pred_fallthru
        _
    $region6: #{tpu_custom_call.1} parent=1 // loop_footer
      %s20 = sadd.s32 1, %s16
    $region7: #{tpu_custom_call.1} parent=1 // loop_footer_branch
      %15 = sbr.rel target = $region3
    $region8: #{tpu_custom_call.1} parent=1 // loop_exit
      _
    %288 = vsyncpa [#allocation3], 1
    %s289 = scalar_lea.sflag [#allocation3], 1
    %290 = vsyncpa %s289, 1
    %291 = vsyncpa [#allocation6], 1
    %292 = vsyncpa [#allocation4], 1
    %s293 = scalar_lea.sflag [#allocation4], 1
    %294 = vsyncpa %s293, 1

</llo_original>
